<compile_context>
chip_gen: v6e
topology: v6e:2x2x1
jax: 0.10.0
libtpu: 0.0.40
codegen_flags: <defaults>
</compile_context>

<pallas_src>
import jax
import jax.numpy as jnp
from jax import lax
from jax.experimental import pallas as pl
from jax.experimental.pallas import tpu as pltpu


def _channel_attention_kernel(x_ref, w1_ref, w2_ref, o_ref, max_ref):
    # x_ref  : (TN, C, THW) tile of the input (spatial flattened)
    # w1_ref : (C//16, C)   fc1 weight (Conv2d 1x1, squeezed), resident
    # w2_ref : (C, C//16)   fc2 weight, resident
    # o_ref  : (TN, C)      sigmoid(fc2(relu(fc1(maxpool(x)))))
    # max_ref: (TN, C)      VMEM running-max accumulator across HW tiles
    k = pl.program_id(1)

    @pl.when(k == 0)
    def _init():
        max_ref[...] = jnp.full(max_ref.shape, -jnp.inf, dtype=max_ref.dtype)

    # One cross-lane (XLU) reduce per HW tile; accumulation across tiles is a
    # pure VPU elementwise max, so the hot loop stays on VLD/VALU slots.
    tile_max = jnp.max(x_ref[...], axis=-1)              # (TN, C)
    max_ref[...] = jnp.maximum(max_ref[...], tile_max)

    @pl.when(k == pl.num_programs(1) - 1)
    def _finish():
        pooled = max_ref[...]                            # (TN, C)
        # fc1: pooled @ w1.T expressed as a transposed contraction (no in-kernel .T).
        y1 = lax.dot_general(pooled, w1_ref[...],
                             dimension_numbers=(((1,), (1,)), ((), ())),
                             preferred_element_type=jnp.float32)
        y1 = jnp.maximum(y1, 0.0)                        # ReLU
        # fc2: y1 @ w2.T
        y2 = lax.dot_general(y1, w2_ref[...],
                             dimension_numbers=(((1,), (1,)), ((), ())),
                             preferred_element_type=jnp.float32)
        # NOTE: if C is not a multiple of 128 this is a masked partial store;
        # harmless at these sizes (pad C for lane-dense stores at scale).
        o_ref[...] = jax.nn.sigmoid(y2).astype(o_ref.dtype)


def _pick_tiles(N, C, HW, tn, thw):
    # Batch tile: keep the (TN, C) output block legal (TN divisible by 8 or == N).
    if tn is None:
        tn = 8 if (N % 8 == 0) else N
    # Spatial tile: largest multiple of 128 dividing HW whose x tile stays
    # under ~4 MiB (so ~8 MiB double-buffered -> safe on v5e/v6e/v7x scoped VMEM).
    if thw is None:
        budget = 4 * 1024 * 1024
        divisible = [c for c in (2048, 1024, 512, 256, 128) if HW % c == 0]
        fitting = [c for c in divisible if tn * C * c * 4 <= budget]
        if fitting:
            thw = fitting[0]
        elif divisible:
            thw = divisible[-1]
        else:
            thw = HW  # tiny / odd spatial extent: single full-width block
    return tn, thw


def channel_attention(x_nchw, w1, w2, *, tn=None, thw=None):
    """x_nchw: (N, C, H, W) float32; w1: (C//16, C); w2: (C, C//16)."""
    N, C, H, W = x_nchw.shape
    hidden = w1.shape[0]
    HW = H * W
    x3 = x_nchw.reshape(N, C, HW)                        # glue reshape (no compute)

    TN, THW = _pick_tiles(N, C, HW, tn, thw)
    grid = (N // TN, HW // THW)                          # HW reduction axis last

    # Explicit scoped-VMEM request: double-buffered x tiles + weights + output
    # + scratch, with headroom.  Clamped so it is valid on all generations.
    x_tile_bytes = TN * C * THW * 4
    vmem_limit = min(
        max(2 * x_tile_bytes + 4 * hidden * C * 4 + 4 * TN * C * 4 + (2 << 20),
            16 * 1024 * 1024),
        48 * 1024 * 1024)

    cost = pl.CostEstimate(
        flops=4 * N * C * hidden,                        # two tiny matmuls
        transcendentals=N * C,                           # sigmoid
        bytes_accessed=N * C * HW * 4 + 2 * hidden * C * 4 + N * C * 4)

    out_nc = pl.pallas_call(
        _channel_attention_kernel,
        out_shape=jax.ShapeDtypeStruct((N, C), jnp.float32),
        grid=grid,
        in_specs=[
            # Input: tiled over batch and spatial; double-buffered by Pallas.
            pl.BlockSpec((TN, C, THW), lambda i, k: (i, 0, k)),
            # Weights: constant index maps -> stay resident, no per-step DMA.
            pl.BlockSpec((hidden, C), lambda i, k: (0, 0)),
            pl.BlockSpec((C, hidden), lambda i, k: (0, 0)),
        ],
        # Same output block across the HW axis -> accumulator-style residency;
        # only written at the last HW step.
        out_specs=pl.BlockSpec((TN, C), lambda i, k: (i, 0)),
        scratch_shapes=[pltpu.VMEM((TN, C), jnp.float32)],
        compiler_params=pltpu.CompilerParams(
            dimension_semantics=("parallel", "arbitrary"),
            vmem_limit_bytes=vmem_limit),
        cost_estimate=cost,
    )(x3, w1, w2)

    return out_nc.reshape(N, C, 1, 1)                    # back to NCHW (N, C, 1, 1)


def reference(x_nchw, w1, w2):
    pooled = jnp.max(x_nchw, axis=(2, 3))                # (N, C)
    y1 = jnp.maximum(pooled @ w1.T, 0.0)
    y2 = y1 @ w2.T
    return jax.nn.sigmoid(y2).reshape(*y2.shape, 1, 1)


if __name__ == "__main__":
    # in_planes must be a multiple of 16 (C//16 hidden channels); keep it small.
    N, C, H, W = 2, 64, 16, 16
    hidden = C // 16

    key = jax.random.PRNGKey(0)
    kx, kw1, kw2 = jax.random.split(key, 3)

    x = jax.random.normal(kx, (N, C, H, W), dtype=jnp.float32)
    # Deterministic synthetic Conv2d(1x1, bias=False) weights, squeezed to 2-D.
    w1 = jax.random.normal(kw1, (hidden, C), dtype=jnp.float32) * 0.1
    w2 = jax.random.normal(kw2, (C, hidden), dtype=jnp.float32) * 0.1

    ref = reference(x, w1, w2)

    # 1) Default auto-picked tiling.
    out = channel_attention(x, w1, w2)
    jax.block_until_ready(out)
    assert out.shape == (N, C, 1, 1)
    assert jnp.allclose(out, ref, atol=1e-5, rtol=1e-5)

    # 2) Force a multi-step HW reduction (THW=128 -> 2 grid steps over HW) to
    #    exercise the running-max accumulator / pl.when init path.
    out_tiled = channel_attention(x, w1, w2, thw=128)
    jax.block_until_ready(out_tiled)
    assert jnp.allclose(out_tiled, ref, atol=1e-5, rtol=1e-5)

    print("KERNEL_OK")
</pallas_src>

<mosaic_0001>
module attributes {stable_mosaic.version = 11 : i64} {
  func.func @_channel_attention_kernel(%arg0: i32, %arg1: i32, %arg2: memref<2x64x256xf32, #tpu.memory_space<vmem>>, %arg3: memref<4x64xf32, #tpu.memory_space<vmem>>, %arg4: memref<64x4xf32, #tpu.memory_space<vmem>>, %arg5: memref<2x64xf32, #tpu.memory_space<vmem>>, %arg6: memref<2x64xf32, #tpu.memory_space<vmem>>) attributes {dimension_semantics = [#tpu.dimension_semantics<parallel>, #tpu.dimension_semantics<arbitrary>], iteration_bounds = array<i64: 1, 1>, scalar_prefetch = 0 : i64, scratch_operands = 1 : i64, tpu.core_type = #tpu.core_type<tc>, window_params = [{transform_indices = @transform_0, window_bounds = array<i64: 2, 64, 256>}, {pipeline_mode = #tpu.pipeline_mode<synchronous>, transform_indices = @transform_1, window_bounds = array<i64: 4, 64>}, {pipeline_mode = #tpu.pipeline_mode<synchronous>, transform_indices = @transform_2, window_bounds = array<i64: 64, 4>}, {transform_indices = @transform_3, window_bounds = array<i64: 2, 64>}]} {
    %c0_i32 = arith.constant 0 : i32
    %0 = arith.cmpi eq, %arg1, %c0_i32 : i32
    %1 = arith.extui %0 : i1 to i32
    %c0_i32_0 = arith.constant 0 : i32
    %2 = arith.cmpi ne, %1, %c0_i32_0 : i32
    scf.if %2 {
      %cst_9 = arith.constant 0xFF800000 : f32
      %11 = vector.broadcast %cst_9 : f32 to vector<2x64xf32>
      %c0_10 = arith.constant 0 : index
      %c0_11 = arith.constant 0 : index
      %12 = vector.load %arg6[%c0_10, %c0_11] : memref<2x64xf32, #tpu.memory_space<vmem>>, vector<2x64xf32>
      tpu.vector_store %arg6[%c0_10, %c0_11], %11 {strides = array<i32>} : memref<2x64xf32, #tpu.memory_space<vmem>>, vector<2x64xf32>,
    } else {
    }
    %c0 = arith.constant 0 : index
    %c0_1 = arith.constant 0 : index
    %c0_2 = arith.constant 0 : index
    %3 = vector.load %arg2[%c0, %c0_1, %c0_2] : memref<2x64x256xf32, #tpu.memory_space<vmem>>, vector<2x64x256xf32>
    %cst = arith.constant dense<0xFF800000> : vector<2x64xf32>
    %4 = vector.multi_reduction <maximumf>, %3, %cst [2] : vector<2x64x256xf32> to vector<2x64xf32>
    %c0_3 = arith.constant 0 : index
    %c0_4 = arith.constant 0 : index
    %5 = vector.load %arg6[%c0_3, %c0_4] : memref<2x64xf32, #tpu.memory_space<vmem>>, vector<2x64xf32>
    %6 = arith.maximumf %5, %4 : vector<2x64xf32>
    %c0_5 = arith.constant 0 : index
    %c0_6 = arith.constant 0 : index
    %7 = vector.load %arg6[%c0_5, %c0_6] : memref<2x64xf32, #tpu.memory_space<vmem>>, vector<2x64xf32>
    tpu.vector_store %arg6[%c0_5, %c0_6], %6 {strides = array<i32>} : memref<2x64xf32, #tpu.memory_space<vmem>>, vector<2x64xf32>,
    %c0_i32_7 = arith.constant 0 : i32
    %8 = arith.cmpi eq, %arg1, %c0_i32_7 : i32
    %9 = arith.extui %8 : i1 to i32
    %c0_i32_8 = arith.constant 0 : i32
    %10 = arith.cmpi ne, %9, %c0_i32_8 : i32
    scf.if %10 {
      %c0_9 = arith.constant 0 : index
      %c0_10 = arith.constant 0 : index
      %11 = vector.load %arg6[%c0_9, %c0_10] : memref<2x64xf32, #tpu.memory_space<vmem>>, vector<2x64xf32>
      %c0_11 = arith.constant 0 : index
      %c0_12 = arith.constant 0 : index
      %12 = vector.load %arg3[%c0_11, %c0_12] : memref<4x64xf32, #tpu.memory_space<vmem>>, vector<4x64xf32>
      %cst_13 = arith.constant dense<0.000000e+00> : vector<2x4xf32>
      %13 = tpu.matmul %11, %12, %cst_13 {dimension_numbers = #tpu.dot_dimension_numbers<[1], [1], [0], [0], [0, 0, 1, 0], [], []>} : vector<2x64xf32>, vector<4x64xf32>, vector<2x4xf32> -> vector<2x4xf32>
      %cst_14 = arith.constant 0.000000e+00 : f32
      %14 = vector.broadcast %cst_14 : f32 to vector<2x4xf32>
      %15 = arith.maximumf %13, %14 : vector<2x4xf32>
      %c0_15 = arith.constant 0 : index
      %c0_16 = arith.constant 0 : index
      %16 = vector.load %arg4[%c0_15, %c0_16] : memref<64x4xf32, #tpu.memory_space<vmem>>, vector<64x4xf32>
      %cst_17 = arith.constant dense<0.000000e+00> : vector<2x64xf32>
      %17 = tpu.matmul %15, %16, %cst_17 {dimension_numbers = #tpu.dot_dimension_numbers<[1], [1], [0], [0], [0, 0, 1, 0], [], []>} : vector<2x4xf32>, vector<64x4xf32>, vector<2x64xf32> -> vector<2x64xf32>
      %18 = arith.negf %17 : vector<2x64xf32>
      %19 = math.exp %18 : vector<2x64xf32>
      %cst_18 = arith.constant 1.000000e+00 : f32
      %20 = vector.broadcast %cst_18 : f32 to vector<2x64xf32>
      %21 = arith.addf %20, %19 : vector<2x64xf32>
      %22 = arith.divf %20, %21 : vector<2x64xf32>
      %c0_19 = arith.constant 0 : index
      %c0_20 = arith.constant 0 : index
      %23 = vector.load %arg5[%c0_19, %c0_20] : memref<2x64xf32, #tpu.memory_space<vmem>>, vector<2x64xf32>
      tpu.vector_store %arg5[%c0_19, %c0_20], %22 {strides = array<i32>} : memref<2x64xf32, #tpu.memory_space<vmem>>, vector<2x64xf32>,
    } else {
    }
    return
  }
  func.func @transform_0(%arg0: i32, %arg1: i32) -> (i32, i32, i32) {
    %c0_i32 = arith.constant 0 : i32
    %c0_i32_0 = arith.constant 0 : i32
    return %arg0, %c0_i32, %arg1 : i32, i32, i32
  }
  func.func @transform_1(%arg0: i32, %arg1: i32) -> (i32, i32) {
    %c0_i32 = arith.constant 0 : i32
    %c0_i32_0 = arith.constant 0 : i32
    %c0_i32_1 = arith.constant 0 : i32
    return %c0_i32, %c0_i32_0 : i32, i32
  }
  func.func @transform_2(%arg0: i32, %arg1: i32) -> (i32, i32) {
    %c0_i32 = arith.constant 0 : i32
    %c0_i32_0 = arith.constant 0 : i32
    %c0_i32_1 = arith.constant 0 : i32
    return %c0_i32, %c0_i32_0 : i32, i32
  }
  func.func @transform_3(%arg0: i32, %arg1: i32) -> (i32, i32) {
    %c0_i32 = arith.constant 0 : i32
    %c0_i32_0 = arith.constant 0 : i32
    return %arg0, %c0_i32 : i32, i32
  }
}

</mosaic_0001>

<llo_original>
// kernel: tpu_custom_call.1
$region0: #{tpu_custom_call.1}
  #allocation0 [shape = 'u32[]', space=smem, size = 0x4, offset = 0x4, fixed_abs, tag = 'smem constant byte address 0x4 - core index']
  #allocation1 [shape = 'u32[144,128]{1,0:T(1,128)}', space=vmem, size = 0x12000, scoped, tag = 'internal scratch']
  #allocation2 [shape = 'f32[2,64]{1,0:T(2,128)}', space=vmem, size = 0x400, scoped, tag = 'scratch operand']
  %s0 = inlined_call_operand.hbm [shape: f32[2,64,256], index: 0, kind: input, shape index: {}]
  %s1 = inlined_call_operand.vmem [shape: f32[4,64], index: 1, kind: input, shape index: {}]
  %s2 = inlined_call_operand.vmem [shape: f32[64,4], index: 2, kind: input, shape index: {}]
  %s3 = inlined_call_operand.hbm [shape: f32[2,64], index: 3, kind: output, shape index: {}]
  %s4 = sld [smem:[#allocation0]]
  $region34: #{tpu_custom_call.1} parent=0
    _
  %s6 = ssub.s32 1, %s4
  %s7 = scalar_select 0, %s6, %s4
  $region1: #{tpu_custom_call.1} parent=0
    #allocation3 [shape = 'u8[131072]{0}', space=vmem, size = 0x20000, scoped, tag = 'input window, operand 0, single buffered']
    #allocation4 [shape = 's32[1]{0}', space=sflag, size = 0x4, scoped, tag = 'scoped memory for tpu_custom_call.1']
    #allocation5 [shape = 's32[1]{0}', space=sflag, size = 0x4, scoped, tag = 'scoped memory for tpu_custom_call.1']
    #allocation6 [shape = 'u8[1024]{0}', space=vmem, size = 0x400, scoped, tag = 'output window, operand 0, single buffered']
    %8 = vsyncpa [#allocation4], 0
    %9 = vsyncpa [#allocation5], 0
    // Predicated region
    $region2: #{tpu_custom_call.1} parent=1 // pred_check
      _
    $region3: #{tpu_custom_call.1} parent=1 // pred_check_branch
      %11 = sbr.rel (0) target = $region5
    $region4: #{tpu_custom_call.1} parent=1 // pred_region
      %s13 = ssub.s32 4096, 4096
      %14 = vsyncadd [#allocation4], %s13
      %s15 = sshll.u32 [#allocation3], 4
      %s16 = int_to_ptr.vmem [resolvable:$true] %s15
      %21 = dma.hbm_to_vmem [thread:$0]  %s0, 4096, %s16, [#allocation4], 256, 256, 16
    $region5: #{tpu_custom_call.1} parent=1 // pred_fallthru
      _
    // Predicated region
    $region6: #{tpu_custom_call.1} parent=1 // pred_check
      _
    $region7: #{tpu_custom_call.1} parent=1 // pred_check_branch
      %23 = sbr.rel (0) target = $region9
    $region8: #{tpu_custom_call.1} parent=1 // pred_region
      _
    $region9: #{tpu_custom_call.1} parent=1 // pred_fallthru
      _
    // Predicated region
    $region10: #{tpu_custom_call.1} parent=1 // pred_check
      _
    $region11: #{tpu_custom_call.1} parent=1 // pred_check_branch
      %25 = sbr.rel (0) target = $region13
    $region12: #{tpu_custom_call.1} parent=1 // pred_region
      _
    $region13: #{tpu_custom_call.1} parent=1 // pred_fallthru
      _
    // Predicated region
    $region14: #{tpu_custom_call.1} parent=1 // pred_check
      _
    $region15: #{tpu_custom_call.1} parent=1 // pred_check_branch
      %27 = sbr.rel (0) target = $region17
    $region16: #{tpu_custom_call.1} parent=1 // pred_region
      %28 = dma.done [#allocation4], 4096
    $region17: #{tpu_custom_call.1} parent=1 // pred_fallthru
      _
    %p29 = scmp.eq.s32.totalorder 0, 0
    // Predicated region
    $region18: #{tpu_custom_call.1} parent=1 // pred_check
      %p30 = pneg %p29
    $region19: #{tpu_custom_call.1} parent=1 // pred_check_branch
      %32 = sbr.rel (%p30) target = $region21
    $region20: #{tpu_custom_call.1} parent=1 // pred_region
      %vm33 = vcmask 517120
      %34 = vst.msk [vmem:[#allocation2] sm:$0x3] %vm33, -inf
    $region21: #{tpu_custom_call.1} parent=1 // pred_fallthru
      _
    %v35 = vld [vmem:[#allocation3] sm:$0xff]
    %v36 = vld [vmem:[#allocation3 + $0x8] sm:$0xff]
    %v37 = vld [vmem:[#allocation3 + $0x10] sm:$0xff]
    %v38 = vld [vmem:[#allocation3 + $0x18] sm:$0xff]
    %v39 = vld [vmem:[#allocation3 + $0x20] sm:$0xff]
    %v40 = vld [vmem:[#allocation3 + $0x28] sm:$0xff]
    %v41 = vld [vmem:[#allocation3 + $0x30] sm:$0xff]
    %v42 = vld [vmem:[#allocation3 + $0x38] sm:$0xff]
    %v43 = vld [vmem:[#allocation3 + $0x40] sm:$0xff]
    %v44 = vld [vmem:[#allocation3 + $0x48] sm:$0xff]
    %v45 = vld [vmem:[#allocation3 + $0x50] sm:$0xff]
    %v46 = vld [vmem:[#allocation3 + $0x58] sm:$0xff]
    %v47 = vld [vmem:[#allocation3 + $0x60] sm:$0xff]
    %v48 = vld [vmem:[#allocation3 + $0x68] sm:$0xff]
    %v49 = vld [vmem:[#allocation3 + $0x70] sm:$0xff]
    %v50 = vld [vmem:[#allocation3 + $0x78] sm:$0xff]
    %v51 = vld [vmem:[#allocation3 + $0x80] sm:$0xff]
    %v52 = vld [vmem:[#allocation3 + $0x88] sm:$0xff]
    %v53 = vld [vmem:[#allocation3 + $0x90] sm:$0xff]
    %v54 = vld [vmem:[#allocation3 + $0x98] sm:$0xff]
    %v55 = vld [vmem:[#allocation3 + $0xa0] sm:$0xff]
    %v56 = vld [vmem:[#allocation3 + $0xa8] sm:$0xff]
    %v57 = vld [vmem:[#allocation3 + $0xb0] sm:$0xff]
    %v58 = vld [vmem:[#allocation3 + $0xb8] sm:$0xff]
    %v59 = vld [vmem:[#allocation3 + $0xc0] sm:$0xff]
    %v60 = vld [vmem:[#allocation3 + $0xc8] sm:$0xff]
    %v61 = vld [vmem:[#allocation3 + $0xd0] sm:$0xff]
    %v62 = vld [vmem:[#allocation3 + $0xd8] sm:$0xff]
    %v63 = vld [vmem:[#allocation3 + $0xe0] sm:$0xff]
    %v64 = vld [vmem:[#allocation3 + $0xe8] sm:$0xff]
    %v65 = vld [vmem:[#allocation3 + $0xf0] sm:$0xff]
    %v66 = vld [vmem:[#allocation3 + $0xf8] sm:$0xff]
    %v67 = vmax.f32 %v35, %v36
    %68 = vmax.xlane.f32.xlu0 %v67
    %v69 = vpop.xlane.xlu0 %68
    %v70 = vmax.f32 %v37, %v38
    %71 = vmax.xlane.f32.xlu0 %v70
    %v72 = vpop.xlane.xlu0 %71
    %v73 = vmax.f32 %v39, %v40
    %74 = vmax.xlane.f32.xlu0 %v73
    %v75 = vpop.xlane.xlu0 %74
    %v76 = vmax.f32 %v41, %v42
    %77 = vmax.xlane.f32.xlu0 %v76
    %v78 = vpop.xlane.xlu0 %77
    %v79 = vmax.f32 %v43, %v44
    %80 = vmax.xlane.f32.xlu0 %v79
    %v81 = vpop.xlane.xlu0 %80
    %v82 = vmax.f32 %v45, %v46
    %83 = vmax.xlane.f32.xlu0 %v82
    %v84 = vpop.xlane.xlu0 %83
    %v85 = vmax.f32 %v47, %v48
    %86 = vmax.xlane.f32.xlu0 %v85
    %v87 = vpop.xlane.xlu0 %86
    %v88 = vmax.f32 %v49, %v50
    %89 = vmax.xlane.f32.xlu0 %v88
    %v90 = vpop.xlane.xlu0 %89
    %v91 = vmax.f32 %v51, %v52
    %92 = vmax.xlane.f32.xlu0 %v91
    %v93 = vpop.xlane.xlu0 %92
    %v94 = vmax.f32 %v53, %v54
    %95 = vmax.xlane.f32.xlu0 %v94
    %v96 = vpop.xlane.xlu0 %95
    %v97 = vmax.f32 %v55, %v56
    %98 = vmax.xlane.f32.xlu0 %v97
    %v99 = vpop.xlane.xlu0 %98
    %v100 = vmax.f32 %v57, %v58
    %101 = vmax.xlane.f32.xlu0 %v100
    %v102 = vpop.xlane.xlu0 %101
    %v103 = vmax.f32 %v59, %v60
    %104 = vmax.xlane.f32.xlu0 %v103
    %v105 = vpop.xlane.xlu0 %104
    %v106 = vmax.f32 %v61, %v62
    %107 = vmax.xlane.f32.xlu0 %v106
    %v108 = vpop.xlane.xlu0 %107
    %v109 = vmax.f32 %v63, %v64
    %110 = vmax.xlane.f32.xlu0 %v109
    %v111 = vpop.xlane.xlu0 %110
    %v112 = vmax.f32 %v65, %v66
    %113 = vmax.xlane.f32.xlu0 %v112
    %v114 = vpop.xlane.xlu0 %113
    %v115 = vld [vmem:[#allocation2] sm:$0x3]
    %v132 = vlaneseq
    %v133 = vand.u32 %v132, 127
    %v134 = vlaneseq
    %v135 = vshrl.u32 %v134, 7
    %v136 = vsub.s32 %v133, %v135
    %v137 = vrot.slane %v69, %v136
    %v138 = vadd.s32 %v133, 4294967288
    %v139 = vlaneseq
    %v140 = vshrl.u32 %v139, 7
    %v141 = vsub.s32 %v138, %v140
    %v142 = vrot.slane %v72, %v141
    %vm143 = vcmask 130112
    %v144 = vsel %vm143, %v142, %v137
    %v145 = vadd.s32 %v133, 4294967280
    %v146 = vlaneseq
    %v147 = vshrl.u32 %v146, 7
    %v148 = vsub.s32 %v145, %v147
    %v149 = vrot.slane %v75, %v148
    %vm150 = vcmask 195712
    %v151 = vsel %vm150, %v149, %v144
    %v152 = vadd.s32 %v133, 4294967272
    %v153 = vlaneseq
    %v154 = vshrl.u32 %v153, 7
    %v155 = vsub.s32 %v152, %v154
    %v156 = vrot.slane %v78, %v155
    %vm157 = vcmask 261312
    %v158 = vsel %vm157, %v156, %v151
    %v159 = vadd.s32 %v133, 4294967264
    %v160 = vlaneseq
    %v161 = vshrl.u32 %v160, 7
    %v162 = vsub.s32 %v159, %v161
    %v163 = vrot.slane %v81, %v162
    %vm164 = vcmask 326912
    %v165 = vsel %vm164, %v163, %v158
    %v166 = vadd.s32 %v133, 4294967256
    %v167 = vlaneseq
    %v168 = vshrl.u32 %v167, 7
    %v169 = vsub.s32 %v166, %v168
    %v170 = vrot.slane %v84, %v169
    %vm171 = vcmask 392512
    %v172 = vsel %vm171, %v170, %v165
    %v173 = vadd.s32 %v133, 4294967248
    %v174 = vlaneseq
    %v175 = vshrl.u32 %v174, 7
    %v176 = vsub.s32 %v173, %v175
    %v177 = vrot.slane %v87, %v176
    %vm178 = vcmask 458112
    %v179 = vsel %vm178, %v177, %v172
    %v180 = vadd.s32 %v133, 4294967240
    %v181 = vlaneseq
    %v182 = vshrl.u32 %v181, 7
    %v183 = vsub.s32 %v180, %v182
    %v184 = vrot.slane %v90, %v183
    %vm185 = vcmask 523712
    %v186 = vsel %vm185, %v184, %v179
    %v187 = vlaneseq
    %v188 = vshrl.u32 %v187, 7
    %v189 = vsub.s32 %v133, %v188
    %v190 = vrot.slane %v93, %v189
    %v191 = vlaneseq
    %v192 = vshrl.u32 %v191, 7
    %v193 = vsub.s32 %v138, %v192
    %v194 = vrot.slane %v96, %v193
    %v195 = vsel %vm143, %v194, %v190
    %v196 = vlaneseq
    %v197 = vshrl.u32 %v196, 7
    %v198 = vsub.s32 %v145, %v197
    %v199 = vrot.slane %v99, %v198
    %v200 = vsel %vm150, %v199, %v195
    %v201 = vlaneseq
    %v202 = vshrl.u32 %v201, 7
    %v203 = vsub.s32 %v152, %v202
    %v204 = vrot.slane %v102, %v203
    %v205 = vsel %vm157, %v204, %v200
    %v206 = vlaneseq
    %v207 = vshrl.u32 %v206, 7
    %v208 = vsub.s32 %v159, %v207
    %v209 = vrot.slane %v105, %v208
    %v210 = vsel %vm164, %v209, %v205
    %v211 = vlaneseq
    %v212 = vshrl.u32 %v211, 7
    %v213 = vsub.s32 %v166, %v212
    %v214 = vrot.slane %v108, %v213
    %v215 = vsel %vm171, %v214, %v210
    %v216 = vlaneseq
    %v217 = vshrl.u32 %v216, 7
    %v218 = vsub.s32 %v173, %v217
    %v219 = vrot.slane %v111, %v218
    %v220 = vsel %vm178, %v219, %v215
    %v221 = vlaneseq
    %v222 = vshrl.u32 %v221, 7
    %v223 = vsub.s32 %v180, %v222
    %v224 = vrot.slane %v114, %v223
    %v225 = vsel %vm185, %v224, %v220
    %vm226 = vcmask 1041409
    %v227 = vsel %vm226, %v225, %v186
    %v229 = vmax.f32 %v115, %v227
    %vm230 = vcmask 517120
    %231 = vst.msk [vmem:[#allocation2] sm:$0x3] %vm230, %v229
    // Predicated region
    $region22: #{tpu_custom_call.1} parent=1 // pred_check
      %p232 = pneg %p29
    $region23: #{tpu_custom_call.1} parent=1 // pred_check_branch
      %234 = sbr.rel (%p232) target = $region25
    $region24: #{tpu_custom_call.1} parent=1 // pred_region
      %v235 = vld [vmem:[#allocation2] sm:$0x3]
      %v236 = vld [vmem:[%s1] sm:$0xf]
      %vm237 = vcmask 523264
      %v239 = vsel %vm237, %v235, 0
      %v242 = vsel %vm237, %v236, 0
      %244 = vmatprep.subr.mxu0 0.0
      %245 = vmatpush1.xpose.msra.mxu0 0.0
      %246 = vmatprep.subr.mxu0 0.0
      %247 = vmatpush1.xpose.msra.mxu0 0.0
      %248 = vmatprep.subr.mxu0 0.0
      %249 = vmatpush1.xpose.msra.mxu0 0.0
      %250 = vmatprep.subr.mxu0 0.0
      %251 = vmatpush1.xpose.msra.mxu0 0.0
      %252 = vmatprep.subr.mxu0 0.0
      %253 = vmatpush1.xpose.msra.mxu0 0.0
      %254 = vmatprep.subr.mxu0 0.0
      %255 = vmatpush1.xpose.msra.mxu0 0.0
      %256 = vmatprep.subr.mxu0 0.0
      %257 = vmatpush1.xpose.msra.mxu0 0.0
      %258 = vmatprep.subr.mxu0 0.0
      %259 = vmatpush1.xpose.msra.mxu0 0.0
      %260 = vmatprep.subr.mxu0 0.0
      %261 = vmatpush1.xpose.msra.mxu0 0.0
      %262 = vmatprep.subr.mxu0 0.0
      %263 = vmatpush1.xpose.msra.mxu0 0.0
      %264 = vmatprep.subr.mxu0 0.0
      %265 = vmatpush1.xpose.msra.mxu0 0.0
      %266 = vmatprep.subr.mxu0 0.0
      %267 = vmatpush1.xpose.msra.mxu0 0.0
      %268 = vmatprep.subr.mxu0 0.0
      %269 = vmatpush1.xpose.msra.mxu0 0.0
      %270 = vmatprep.subr.mxu0 0.0
      %271 = vmatpush1.xpose.msra.mxu0 0.0
      %272 = vmatprep.subr.mxu0 0.0
      %273 = vmatpush1.xpose.msra.mxu0 0.0
      %274 = vmatprep.subr.mxu0 0.0
      %275 = vmatpush1.xpose.msra.mxu0 %v242
      %276 = vmatprep.subr.mxu0 0.0
      %277 = vmatpush2.xpose.msra.mxu0 0.0
      %278 = vmatprep.subr.mxu0 0.0
      %279 = vmatpush2.xpose.msra.mxu0 0.0
      %280 = vmatprep.subr.mxu0 0.0
      %281 = vmatpush2.xpose.msra.mxu0 0.0
      %282 = vmatprep.subr.mxu0 0.0
      %283 = vmatpush2.xpose.msra.mxu0 0.0
      %284 = vmatprep.subr.mxu0 0.0
      %285 = vmatpush2.xpose.msra.mxu0 0.0
      %286 = vmatprep.subr.mxu0 0.0
      %287 = vmatpush2.xpose.msra.mxu0 0.0
      %288 = vmatprep.subr.mxu0 0.0
      %289 = vmatpush2.xpose.msra.mxu0 0.0
      %290 = vmatprep.subr.mxu0 0.0
      %291 = vmatpush2.xpose.msra.mxu0 0.0
      %292 = vmatprep.subr.mxu0 0.0
      %293 = vmatpush2.xpose.msra.mxu0 0.0
      %294 = vmatprep.subr.mxu0 0.0
      %295 = vmatpush2.xpose.msra.mxu0 0.0
      %296 = vmatprep.subr.mxu0 0.0
      %297 = vmatpush2.xpose.msra.mxu0 0.0
      %298 = vmatprep.subr.mxu0 0.0
      %299 = vmatpush2.xpose.msra.mxu0 0.0
      %300 = vmatprep.subr.mxu0 0.0
      %301 = vmatpush2.xpose.msra.mxu0 0.0
      %302 = vmatprep.subr.mxu0 0.0
      %303 = vmatpush2.xpose.msra.mxu0 0.0
      %304 = vmatprep.subr.mxu0 0.0
      %305 = vmatpush2.xpose.msra.mxu0 0.0
      %306 = vmatprep.subr.mxu0 0.0
      %307 = vmatpush2.xpose.msra.mxu0 0.0
      %308 = vmatprep.mubr.f32.mxu0 0.0
      %309 = vmatmul.mubr.f32.gmra.mxu0 %v239
      %v310 = vpop.f32.mrf.mxu0
      %v311 = vadd.f32 0.0, %v310
      %v312 = vpop.f32.mrf.mxu0
      %313 = vdwg.mxu0
      %v314 = vmax.f32 %v311, 0.0
      %v315 = vld [vmem:[%s2] sm:$0xff]
      %v316 = vld [vmem:[%s2 + $0x8] sm:$0xff]
      %v317 = vld [vmem:[%s2 + $0x10] sm:$0xff]
      %v318 = vld [vmem:[%s2 + $0x18] sm:$0xff]
      %v319 = vld [vmem:[%s2 + $0x20] sm:$0xff]
      %v320 = vld [vmem:[%s2 + $0x28] sm:$0xff]
      %v321 = vld [vmem:[%s2 + $0x30] sm:$0xff]
      %v322 = vld [vmem:[%s2 + $0x38] sm:$0xff]
      %vm323 = vcmask 31744
      %v325 = vsel %vm323, %v314, 0
      %v328 = vsel %vm323, %v315, 0
      %v331 = vsel %vm323, %v316, 0
      %v334 = vsel %vm323, %v317, 0
      %v337 = vsel %vm323, %v318, 0
      %v340 = vsel %vm323, %v319, 0
      %v343 = vsel %vm323, %v320, 0
      %v346 = vsel %vm323, %v321, 0
      %v349 = vsel %vm323, %v322, 0
      %351 = vmatprep.subr.mxu0 0.0
      %352 = vmatpush1.xpose.msra.mxu0 0.0
      %353 = vmatprep.subr.mxu0 0.0
      %354 = vmatpush1.xpose.msra.mxu0 0.0
      %355 = vmatprep.subr.mxu0 0.0
      %356 = vmatpush1.xpose.msra.mxu0 0.0
      %357 = vmatprep.subr.mxu0 0.0
      %358 = vmatpush1.xpose.msra.mxu0 0.0
      %359 = vmatprep.subr.mxu0 0.0
      %360 = vmatpush1.xpose.msra.mxu0 0.0
      %361 = vmatprep.subr.mxu0 0.0
      %362 = vmatpush1.xpose.msra.mxu0 0.0
      %363 = vmatprep.subr.mxu0 0.0
      %364 = vmatpush1.xpose.msra.mxu0 0.0
      %365 = vmatprep.subr.mxu0 0.0
      %366 = vmatpush1.xpose.msra.mxu0 0.0
      %367 = vmatprep.subr.mxu0 0.0
      %368 = vmatpush1.xpose.msra.mxu0 %v349
      %369 = vmatprep.subr.mxu0 0.0
      %370 = vmatpush1.xpose.msra.mxu0 %v346
      %371 = vmatprep.subr.mxu0 0.0
      %372 = vmatpush1.xpose.msra.mxu0 %v343
      %373 = vmatprep.subr.mxu0 0.0
      %374 = vmatpush1.xpose.msra.mxu0 %v340
      %375 = vmatprep.subr.mxu0 0.0
      %376 = vmatpush1.xpose.msra.mxu0 %v337
      %377 = vmatprep.subr.mxu0 0.0
      %378 = vmatpush1.xpose.msra.mxu0 %v334
      %379 = vmatprep.subr.mxu0 0.0
      %380 = vmatpush1.xpose.msra.mxu0 %v331
      %381 = vmatprep.subr.mxu0 0.0
      %382 = vmatpush1.xpose.msra.mxu0 %v328
      %383 = vmatprep.subr.mxu0 0.0
      %384 = vmatpush2.xpose.msra.mxu0 0.0
      %385 = vmatprep.subr.mxu0 0.0
      %386 = vmatpush2.xpose.msra.mxu0 0.0
      %387 = vmatprep.subr.mxu0 0.0
      %388 = vmatpush2.xpose.msra.mxu0 0.0
      %389 = vmatprep.subr.mxu0 0.0
      %390 = vmatpush2.xpose.msra.mxu0 0.0
      %391 = vmatprep.subr.mxu0 0.0
      %392 = vmatpush2.xpose.msra.mxu0 0.0
      %393 = vmatprep.subr.mxu0 0.0
      %394 = vmatpush2.xpose.msra.mxu0 0.0
      %395 = vmatprep.subr.mxu0 0.0
      %396 = vmatpush2.xpose.msra.mxu0 0.0
      %397 = vmatprep.subr.mxu0 0.0
      %398 = vmatpush2.xpose.msra.mxu0 0.0
      %399 = vmatprep.subr.mxu0 0.0
      %400 = vmatpush2.xpose.msra.mxu0 0.0
      %401 = vmatprep.subr.mxu0 0.0
      %402 = vmatpush2.xpose.msra.mxu0 0.0
      %403 = vmatprep.subr.mxu0 0.0
      %404 = vmatpush2.xpose.msra.mxu0 0.0
      %405 = vmatprep.subr.mxu0 0.0
      %406 = vmatpush2.xpose.msra.mxu0 0.0
      %407 = vmatprep.subr.mxu0 0.0
      %408 = vmatpush2.xpose.msra.mxu0 0.0
      %409 = vmatprep.subr.mxu0 0.0
      %410 = vmatpush2.xpose.msra.mxu0 0.0
      %411 = vmatprep.subr.mxu0 0.0
      %412 = vmatpush2.xpose.msra.mxu0 0.0
      %413 = vmatprep.subr.mxu0 0.0
      %414 = vmatpush2.xpose.msra.mxu0 0.0
      %415 = vmatprep.mubr.f32.mxu0 0.0
      %416 = vmatmul.mubr.f32.gmra.mxu0 %v325
      %v417 = vpop.f32.mrf.mxu0
      %v418 = vadd.f32 0.0, %v417
      %v419 = vpop.f32.mrf.mxu0
      %420 = vdwg.mxu0
      %v421 = vxor.u32 %v418, 2147483648
      %v422 = vmul.f32 %v421, 1.442695
      %v423 = vpow.pop %v422
      %v424 = vadd.f32 %v423, 1.0
      %v425 = vrcp.pop %v424
      %v426 = vmul.f32 1.0, %v425
      %427 = vst.msk [vmem:[#allocation6] sm:$0x3] %vm230, %v426
    $region25: #{tpu_custom_call.1} parent=1 // pred_fallthru
      _
    // Predicated region
    $region26: #{tpu_custom_call.1} parent=1 // pred_check
      _
    $region27: #{tpu_custom_call.1} parent=1 // pred_check_branch
      %429 = sbr.rel (0) target = $region29
    $region28: #{tpu_custom_call.1} parent=1 // pred_region
      %s431 = ssub.s32 32, 32
      %432 = vsyncadd [#allocation5], %s431
      %s434 = sshll.u32 [#allocation6], 4
      %s435 = int_to_ptr.vmem [resolvable:$true] %s434
      %437 = dma.vmem_to_hbm [thread:$0]  %s435, 32, %s3, [#allocation5]
    $region29: #{tpu_custom_call.1} parent=1 // pred_fallthru
      _
    // Predicated region
    $region30: #{tpu_custom_call.1} parent=1 // pred_check
      _
    $region31: #{tpu_custom_call.1} parent=1 // pred_check_branch
      %439 = sbr.rel (0) target = $region33
    $region32: #{tpu_custom_call.1} parent=1 // pred_region
      %440 = dma.done [#allocation5], 32
    $region33: #{tpu_custom_call.1} parent=1 // pred_fallthru
      _
    %441 = vsyncpa [#allocation4], 1
    %442 = vsyncpa [#allocation5], 1

</llo_original>
